<compile_context>
chip_gen: v5e
topology: v5e:2x2
jax: 0.10.0
libtpu: 0.0.40
codegen_flags: <defaults>
</compile_context>

<pallas_src>
import functools
import math

import jax
import jax.numpy as jnp
from jax import lax
from jax.experimental import pallas as pl
from jax.experimental.pallas import tpu as pltpu

SR = 44100  # sample rate, like FMSynth(sr=...)


def _fm_synth_kernel(tri_ref, cf_ref, hr_ref, mi_ref, out_ref,
                     mod_carry_ref, car_carry_ref, *, inv_sr: float):
    # Reset the running-phase carries at the start of each batch-block's
    # sweep over the time axis (time is the innermost grid axis).
    @pl.when(pl.program_id(1) == 0)
    def _():
        mod_carry_ref[...] = jnp.zeros_like(mod_carry_ref)
        car_carry_ref[...] = jnp.zeros_like(car_carry_ref)

    tri = tri_ref[...]          # (tc, tc) strictly-upper-triangular ones (resident)
    cf = cf_ref[...]            # carrier_frequency   (bm, tc)
    hr = hr_ref[...]            # harmonicity_ratio   (bm, tc)
    mi = mi_ref[...]            # modulation_index    (bm, tc)

    two_pi = jnp.float32(2.0 * math.pi)

    # ---- modulator sinewave ----
    mod_freq = cf * hr
    mod_inc = mod_freq * inv_sr
    # chunk-local exclusive cumsum on the MXU: local[:, j] = sum_{s<j} inc[:, s]
    mod_local = jnp.dot(mod_inc, tri, preferred_element_type=jnp.float32)
    mod_phase = mod_carry_ref[...] + mod_local
    mod_buf = jnp.sin(two_pi * (mod_phase - jnp.floor(mod_phase)))
    # Advance carry by the full-chunk sum; wrap mod 1.0 (only the fractional
    # part matters for sin(2*pi*x)) to keep precision on long signals.
    mc = mod_carry_ref[...] + jnp.sum(mod_inc, axis=-1, keepdims=True)
    mod_carry_ref[...] = mc - jnp.floor(mc)

    # ---- carrier sinewave ----
    car_freq = cf + mod_buf * (mod_freq * mi)
    car_inc = car_freq * inv_sr
    car_local = jnp.dot(car_inc, tri, preferred_element_type=jnp.float32)
    car_phase = car_carry_ref[...] + car_local
    out_ref[...] = jnp.sin(two_pi * (car_phase - jnp.floor(car_phase)))
    cc = car_carry_ref[...] + jnp.sum(car_inc, axis=-1, keepdims=True)
    car_carry_ref[...] = cc - jnp.floor(cc)


def _round_up(x: int, m: int) -> int:
    return ((x + m - 1) // m) * m


def fm_synth(carrier_frequency, harmonicity_ratio, modulation_index,
             sr: int = SR, block_batch=None, time_chunk: int = 256):
    cf = jnp.asarray(carrier_frequency, jnp.float32)
    hr = jnp.asarray(harmonicity_ratio, jnp.float32)
    mi = jnp.asarray(modulation_index, jnp.float32)
    B, T = cf.shape

    # Time-chunk size: lane-aligned (multiple of 128), capped so VMEM and MXU
    # cost stay O(T * tc); 256 fills the v6e/v7x MXU, 128 is one v5e pass.
    tc = min(_round_up(time_chunk, 128), _round_up(T, 128))
    T_pad = _round_up(T, tc)

    # Batch block: sublane-aligned, large enough to fill the MXU M dimension.
    B_pad = _round_up(B, 8)
    bm = min(B_pad, 256) if block_batch is None else block_batch
    assert bm % 8 == 0, "block_batch must be a multiple of 8"
    B_pad = _round_up(B_pad, bm)

    if (B_pad, T_pad) != (B, T):
        pad = ((0, B_pad - B), (0, T_pad - T))
        cf = jnp.pad(cf, pad)
        hr = jnp.pad(hr, pad)
        mi = jnp.pad(mi, pad)

    # Constant strictly-upper-triangular ones matrix, built once in the
    # wrapper and passed in; its block index never changes so Pallas DMAs it
    # once and keeps it resident in VMEM.
    row = lax.broadcasted_iota(jnp.int32, (tc, tc), 0)
    col = lax.broadcasted_iota(jnp.int32, (tc, tc), 1)
    tri = (row < col).astype(jnp.float32)

    kernel = functools.partial(_fm_synth_kernel, inv_sr=1.0 / float(sr))

    out = pl.pallas_call(
        kernel,
        out_shape=jax.ShapeDtypeStruct((B_pad, T_pad), jnp.float32),
        grid_spec=pltpu.PrefetchScalarGridSpec(
            num_scalar_prefetch=0,
            grid=(B_pad // bm, T_pad // tc),
            in_specs=[
                pl.BlockSpec((tc, tc), lambda i, t: (0, 0)),  # tri (resident)
                pl.BlockSpec((bm, tc), lambda i, t: (i, t)),  # carrier freq
                pl.BlockSpec((bm, tc), lambda i, t: (i, t)),  # harmonicity
                pl.BlockSpec((bm, tc), lambda i, t: (i, t)),  # mod index
            ],
            out_specs=pl.BlockSpec((bm, tc), lambda i, t: (i, t)),
            scratch_shapes=[
                pltpu.VMEM((bm, 1), jnp.float32),  # modulator phase carry
                pltpu.VMEM((bm, 1), jnp.float32),  # carrier phase carry
            ],
        ),
        compiler_params=pltpu.CompilerParams(
            dimension_semantics=("parallel", "arbitrary")),
    )(tri, cf, hr, mi)

    return out[:B, :T]


def _fm_synth_ref(cf, hr, mi, sr):
    """Pure-JAX reference mirroring the PyTorch module exactly."""
    def sinewave(freq):
        increment = freq[..., :-1] / sr
        phase = jnp.cumsum(increment, axis=-1)
        phase = jnp.concatenate(
            [jnp.zeros_like(freq[..., :1]), phase], axis=-1)
        phasor = phase - jnp.floor(phase)   # wrap(phase, 0, 1)
        return jnp.sin(2.0 * jnp.pi * phasor)

    mod_freq = cf * hr
    mod_buf = sinewave(mod_freq)
    mod_amp = mod_freq * mi
    return sinewave(cf + mod_buf * mod_amp)


if __name__ == "__main__":
    key = jax.random.PRNGKey(0)

    # --- primary check: small shape, single time chunk ---
    k1, k2, k3 = jax.random.split(key, 3)
    B, T = 16, 128
    carrier_frequency = 100.0 + 900.0 * jax.random.uniform(k1, (B, T), jnp.float32)
    harmonicity_ratio = 0.5 + 3.5 * jax.random.uniform(k2, (B, T), jnp.float32)
    modulation_index = 5.0 * jax.random.uniform(k3, (B, T), jnp.float32)

    out = jax.block_until_ready(
        fm_synth(carrier_frequency, harmonicity_ratio, modulation_index, SR))
    ref = _fm_synth_ref(carrier_frequency, harmonicity_ratio, modulation_index, SR)
    assert out.shape == (B, T) and out.dtype == jnp.float32
    assert jnp.allclose(out, ref, atol=1e-3, rtol=1e-3), "mismatch vs reference"

    # --- secondary check: multiple time chunks exercise the phase carry ---
    k4, k5, k6 = jax.random.split(jax.random.PRNGKey(1), 3)
    B2, T2 = 16, 512
    cf2 = 100.0 + 300.0 * jax.random.uniform(k4, (B2, T2), jnp.float32)
    hr2 = 0.5 + 1.5 * jax.random.uniform(k5, (B2, T2), jnp.float32)
    mi2 = 2.0 * jax.random.uniform(k6, (B2, T2), jnp.float32)

    out2 = jax.block_until_ready(fm_synth(cf2, hr2, mi2, SR, time_chunk=128))
    ref2 = _fm_synth_ref(cf2, hr2, mi2, SR)
    assert out2.shape == (B2, T2) and out2.dtype == jnp.float32
    assert jnp.allclose(out2, ref2, atol=2e-3, rtol=2e-3), "mismatch vs reference (chunked)"

    print("KERNEL_OK")
</pallas_src>

<mosaic_0001>
module attributes {stable_mosaic.version = 11 : i64} {
  func.func @_fm_synth_kernel(%arg0: i32, %arg1: i32, %arg2: memref<128x128xf32, #tpu.memory_space<vmem>>, %arg3: memref<16x128xf32, #tpu.memory_space<vmem>>, %arg4: memref<16x128xf32, #tpu.memory_space<vmem>>, %arg5: memref<16x128xf32, #tpu.memory_space<vmem>>, %arg6: memref<16x128xf32, #tpu.memory_space<vmem>>, %arg7: memref<16x1xf32, #tpu.memory_space<vmem>>, %arg8: memref<16x1xf32, #tpu.memory_space<vmem>>) attributes {dimension_semantics = [#tpu.dimension_semantics<parallel>, #tpu.dimension_semantics<arbitrary>], iteration_bounds = array<i64: 1, 1>, scalar_prefetch = 0 : i64, scratch_operands = 2 : i64, tpu.core_type = #tpu.core_type<tc>, window_params = [{pipeline_mode = #tpu.pipeline_mode<synchronous>, transform_indices = @transform_0, window_bounds = array<i64: 128, 128>}, {transform_indices = @transform_1, window_bounds = array<i64: 16, 128>}, {transform_indices = @transform_2, window_bounds = array<i64: 16, 128>}, {transform_indices = @transform_3, window_bounds = array<i64: 16, 128>}, {transform_indices = @transform_4, window_bounds = array<i64: 16, 128>}]} {
    %c0_i32 = arith.constant 0 : i32
    %0 = arith.cmpi eq, %arg1, %c0_i32 : i32
    %1 = arith.extui %0 : i1 to i32
    %c0_i32_0 = arith.constant 0 : i32
    %2 = arith.cmpi ne, %1, %c0_i32_0 : i32
    scf.if %2 {
      %cst_29 = arith.constant 0.000000e+00 : f32
      %48 = vector.broadcast %cst_29 : f32 to vector<16x1xf32>
      %c0_30 = arith.constant 0 : index
      %c0_31 = arith.constant 0 : index
      %49 = vector.load %arg7[%c0_30, %c0_31] : memref<16x1xf32, #tpu.memory_space<vmem>>, vector<16x1xf32>
      tpu.vector_store %arg7[%c0_30, %c0_31], %48 {strides = array<i32>} : memref<16x1xf32, #tpu.memory_space<vmem>>, vector<16x1xf32>,
      %cst_32 = arith.constant 0.000000e+00 : f32
      %50 = vector.broadcast %cst_32 : f32 to vector<16x1xf32>
      %c0_33 = arith.constant 0 : index
      %c0_34 = arith.constant 0 : index
      %51 = vector.load %arg8[%c0_33, %c0_34] : memref<16x1xf32, #tpu.memory_space<vmem>>, vector<16x1xf32>
      tpu.vector_store %arg8[%c0_33, %c0_34], %50 {strides = array<i32>} : memref<16x1xf32, #tpu.memory_space<vmem>>, vector<16x1xf32>,
    } else {
    }
    %c0 = arith.constant 0 : index
    %c0_1 = arith.constant 0 : index
    %3 = vector.load %arg2[%c0, %c0_1] : memref<128x128xf32, #tpu.memory_space<vmem>>, vector<128x128xf32>
    %c0_2 = arith.constant 0 : index
    %c0_3 = arith.constant 0 : index
    %4 = vector.load %arg3[%c0_2, %c0_3] : memref<16x128xf32, #tpu.memory_space<vmem>>, vector<16x128xf32>
    %c0_4 = arith.constant 0 : index
    %c0_5 = arith.constant 0 : index
    %5 = vector.load %arg4[%c0_4, %c0_5] : memref<16x128xf32, #tpu.memory_space<vmem>>, vector<16x128xf32>
    %c0_6 = arith.constant 0 : index
    %c0_7 = arith.constant 0 : index
    %6 = vector.load %arg5[%c0_6, %c0_7] : memref<16x128xf32, #tpu.memory_space<vmem>>, vector<16x128xf32>
    %7 = arith.mulf %4, %5 : vector<16x128xf32>
    %cst = arith.constant 2.26757365E-5 : f32
    %8 = vector.broadcast %cst : f32 to vector<16x128xf32>
    %9 = arith.mulf %7, %8 : vector<16x128xf32>
    %cst_8 = arith.constant dense<0.000000e+00> : vector<16x128xf32>
    %10 = tpu.matmul %9, %3, %cst_8 {dimension_numbers = #tpu.dot_dimension_numbers<[1], [0], [0], [1], [0, 0, 1, 1], [], []>} : vector<16x128xf32>, vector<128x128xf32>, vector<16x128xf32> -> vector<16x128xf32>
    %c0_9 = arith.constant 0 : index
    %c0_10 = arith.constant 0 : index
    %11 = vector.load %arg7[%c0_9, %c0_10] : memref<16x1xf32, #tpu.memory_space<vmem>>, vector<16x1xf32>
    %12 = vector.broadcast %11 : vector<16x1xf32> to vector<16x128xf32>
    %13 = arith.addf %12, %10 : vector<16x128xf32>
    %14 = math.floor %13 : vector<16x128xf32>
    %15 = arith.subf %13, %14 : vector<16x128xf32>
    %cst_11 = arith.constant 6.28318548 : f32
    %16 = vector.broadcast %cst_11 : f32 to vector<16x128xf32>
    %17 = arith.mulf %16, %15 : vector<16x128xf32>
    %18 = math.sin %17 : vector<16x128xf32>
    %c0_12 = arith.constant 0 : index
    %c0_13 = arith.constant 0 : index
    %19 = vector.load %arg7[%c0_12, %c0_13] : memref<16x1xf32, #tpu.memory_space<vmem>>, vector<16x1xf32>
    %cst_14 = arith.constant dense<0.000000e+00> : vector<16xf32>
    %20 = vector.multi_reduction <add>, %9, %cst_14 [1] : vector<16x128xf32> to vector<16xf32>
    %21 = vector.shape_cast %20 : vector<16xf32> to vector<16x1xf32>
    %22 = arith.addf %19, %21 : vector<16x1xf32>
    %23 = math.floor %22 : vector<16x1xf32>
    %24 = arith.subf %22, %23 : vector<16x1xf32>
    %c0_15 = arith.constant 0 : index
    %c0_16 = arith.constant 0 : index
    %25 = vector.load %arg7[%c0_15, %c0_16] : memref<16x1xf32, #tpu.memory_space<vmem>>, vector<16x1xf32>
    tpu.vector_store %arg7[%c0_15, %c0_16], %24 {strides = array<i32>} : memref<16x1xf32, #tpu.memory_space<vmem>>, vector<16x1xf32>,
    %26 = arith.mulf %7, %6 : vector<16x128xf32>
    %27 = arith.mulf %18, %26 : vector<16x128xf32>
    %28 = arith.addf %4, %27 : vector<16x128xf32>
    %cst_17 = arith.constant 2.26757365E-5 : f32
    %29 = vector.broadcast %cst_17 : f32 to vector<16x128xf32>
    %30 = arith.mulf %28, %29 : vector<16x128xf32>
    %cst_18 = arith.constant dense<0.000000e+00> : vector<16x128xf32>
    %31 = tpu.matmul %30, %3, %cst_18 {dimension_numbers = #tpu.dot_dimension_numbers<[1], [0], [0], [1], [0, 0, 1, 1], [], []>} : vector<16x128xf32>, vector<128x128xf32>, vector<16x128xf32> -> vector<16x128xf32>
    %c0_19 = arith.constant 0 : index
    %c0_20 = arith.constant 0 : index
    %32 = vector.load %arg8[%c0_19, %c0_20] : memref<16x1xf32, #tpu.memory_space<vmem>>, vector<16x1xf32>
    %33 = vector.broadcast %32 : vector<16x1xf32> to vector<16x128xf32>
    %34 = arith.addf %33, %31 : vector<16x128xf32>
    %35 = math.floor %34 : vector<16x128xf32>
    %36 = arith.subf %34, %35 : vector<16x128xf32>
    %cst_21 = arith.constant 6.28318548 : f32
    %37 = vector.broadcast %cst_21 : f32 to vector<16x128xf32>
    %38 = arith.mulf %37, %36 : vector<16x128xf32>
    %39 = math.sin %38 : vector<16x128xf32>
    %c0_22 = arith.constant 0 : index
    %c0_23 = arith.constant 0 : index
    %40 = vector.load %arg6[%c0_22, %c0_23] : memref<16x128xf32, #tpu.memory_space<vmem>>, vector<16x128xf32>
    tpu.vector_store %arg6[%c0_22, %c0_23], %39 {strides = array<i32>} : memref<16x128xf32, #tpu.memory_space<vmem>>, vector<16x128xf32>,
    %c0_24 = arith.constant 0 : index
    %c0_25 = arith.constant 0 : index
    %41 = vector.load %arg8[%c0_24, %c0_25] : memref<16x1xf32, #tpu.memory_space<vmem>>, vector<16x1xf32>
    %cst_26 = arith.constant dense<0.000000e+00> : vector<16xf32>
    %42 = vector.multi_reduction <add>, %30, %cst_26 [1] : vector<16x128xf32> to vector<16xf32>
    %43 = vector.shape_cast %42 : vector<16xf32> to vector<16x1xf32>
    %44 = arith.addf %41, %43 : vector<16x1xf32>
    %45 = math.floor %44 : vector<16x1xf32>
    %46 = arith.subf %44, %45 : vector<16x1xf32>
    %c0_27 = arith.constant 0 : index
    %c0_28 = arith.constant 0 : index
    %47 = vector.load %arg8[%c0_27, %c0_28] : memref<16x1xf32, #tpu.memory_space<vmem>>, vector<16x1xf32>
    tpu.vector_store %arg8[%c0_27, %c0_28], %46 {strides = array<i32>} : memref<16x1xf32, #tpu.memory_space<vmem>>, vector<16x1xf32>,
    return
  }
  func.func @transform_0(%arg0: i32, %arg1: i32) -> (i32, i32) {
    %c0_i32 = arith.constant 0 : i32
    %c0_i32_0 = arith.constant 0 : i32
    %c0_i32_1 = arith.constant 0 : i32
    return %c0_i32, %c0_i32_0 : i32, i32
  }
  func.func @transform_1(%arg0: i32, %arg1: i32) -> (i32, i32) {
    %c0_i32 = arith.constant 0 : i32
    return %arg0, %arg1 : i32, i32
  }
  func.func @transform_2(%arg0: i32, %arg1: i32) -> (i32, i32) {
    %c0_i32 = arith.constant 0 : i32
    return %arg0, %arg1 : i32, i32
  }
  func.func @transform_3(%arg0: i32, %arg1: i32) -> (i32, i32) {
    %c0_i32 = arith.constant 0 : i32
    return %arg0, %arg1 : i32, i32
  }
  func.func @transform_4(%arg0: i32, %arg1: i32) -> (i32, i32) {
    %c0_i32 = arith.constant 0 : i32
    return %arg0, %arg1 : i32, i32
  }
}

</mosaic_0001>

<llo_original>
// kernel: tpu_custom_call.1
$region0: #{tpu_custom_call.1}
  #allocation0 [shape = 'u32[]', space=smem, size = 0x4, offset = 0x4, fixed_abs, tag = 'smem constant byte address 0x4 - core index']
  #allocation1 [shape = 'u32[72,128]{1,0:T(1,128)}', space=vmem, size = 0x9000, scoped, tag = 'internal scratch']
  #allocation2 [shape = 'f32[16,1]{1,0:T(8,128)}', space=vmem, size = 0x2000, scoped, tag = 'scratch operand']
  #allocation3 [shape = 'f32[16,1]{1,0:T(8,128)}', space=vmem, size = 0x2000, scoped, tag = 'scratch operand']
  %s0 = inlined_call_operand.hbm [shape: f32[128,128], index: 0, kind: input, shape index: {}]
  %s1 = inlined_call_operand.hbm [shape: f32[16,128], index: 1, kind: input, shape index: {}]
  %s2 = inlined_call_operand.hbm [shape: f32[16,128], index: 2, kind: input, shape index: {}]
  %s3 = inlined_call_operand.hbm [shape: f32[16,128], index: 3, kind: input, shape index: {}]
  %s4 = inlined_call_operand.hbm [shape: f32[16,128], index: 4, kind: output, shape index: {}]
  %s5 = sld [smem:[#allocation0]]
  $region46: #{tpu_custom_call.1} parent=0
    _
  %s7 = ssub.s32 1, %s5
  %s8 = scalar_select 0, %s7, %s5
  $region1: #{tpu_custom_call.1} parent=0
    #allocation4 [shape = 'u8[65536]{0}', space=vmem, size = 0x10000, scoped, tag = 'input window, operand 0, single buffered']
    #allocation5 [shape = 's32[1]{0}', space=sflag, size = 0x4, scoped, tag = 'scoped memory for tpu_custom_call.1']
    #allocation6 [shape = 's32[1]{0}', space=sflag, size = 0x4, scoped, tag = 'scoped memory for tpu_custom_call.1']
    #allocation7 [shape = 'u8[8192]{0}', space=vmem, size = 0x2000, scoped, tag = 'input window, operand 1, single buffered']
    #allocation8 [shape = 's32[1]{0}', space=sflag, size = 0x4, scoped, tag = 'scoped memory for tpu_custom_call.1']
    #allocation9 [shape = 'u8[8192]{0}', space=vmem, size = 0x2000, scoped, tag = 'input window, operand 2, single buffered']
    #allocation10 [shape = 'u8[8192]{0}', space=vmem, size = 0x2000, scoped, tag = 'input window, operand 3, single buffered']
    #allocation11 [shape = 's32[1]{0}', space=sflag, size = 0x4, scoped, tag = 'scoped memory for tpu_custom_call.1']
    #allocation12 [shape = 'u8[8192]{0}', space=vmem, size = 0x2000, scoped, tag = 'output window, operand 0, single buffered']
    %9 = vsyncpa [#allocation5], 0
    %10 = vsyncpa [#allocation8], 0
    %11 = vsyncpa [#allocation11], 0
    %12 = vsyncpa [#allocation6], 0
    // Predicated region
    $region2: #{tpu_custom_call.1} parent=1 // pred_check
      _
    $region3: #{tpu_custom_call.1} parent=1 // pred_check_branch
      %14 = sbr.rel (0) target = $region5
    $region4: #{tpu_custom_call.1} parent=1 // pred_region
      %16 = vsyncadd [#allocation5], 0
      %s17 = sshll.u32 %s0, 4
      %s18 = int_to_ptr.hbm [resolvable:$true] %s17
      %s19 = sshll.u32 [#allocation4], 4
      %s20 = int_to_ptr.vmem [resolvable:$true] %s19
      %25 = dma.hbm_to_vmem [thread:$0]  %s18, 2048, %s20, [#allocation5], 128, 128, 8
    $region5: #{tpu_custom_call.1} parent=1 // pred_fallthru
      _
    // Predicated region
    $region6: #{tpu_custom_call.1} parent=1 // pred_check
      _
    $region7: #{tpu_custom_call.1} parent=1 // pred_check_branch
      %27 = sbr.rel (0) target = $region9
    $region8: #{tpu_custom_call.1} parent=1 // pred_region
      %29 = vsyncadd [#allocation8], 0
      %s30 = sshll.u32 %s1, 4
      %s31 = int_to_ptr.hbm [resolvable:$true] %s30
      %s32 = sshll.u32 [#allocation7], 4
      %s33 = int_to_ptr.vmem [resolvable:$true] %s32
      %38 = dma.hbm_to_vmem [thread:$0]  %s31, 256, %s33, [#allocation8], 128, 128, 8
    $region9: #{tpu_custom_call.1} parent=1 // pred_fallthru
      _
    // Predicated region
    $region10: #{tpu_custom_call.1} parent=1 // pred_check
      _
    $region11: #{tpu_custom_call.1} parent=1 // pred_check_branch
      %40 = sbr.rel (0) target = $region13
    $region12: #{tpu_custom_call.1} parent=1 // pred_region
      %42 = vsyncadd [#allocation8], 0
      %s43 = sshll.u32 %s2, 4
      %s44 = int_to_ptr.hbm [resolvable:$true] %s43
      %s45 = sshll.u32 [#allocation9], 4
      %s46 = int_to_ptr.vmem [resolvable:$true] %s45
      %51 = dma.hbm_to_vmem [thread:$0]  %s44, 256, %s46, [#allocation8], 128, 128, 8
    $region13: #{tpu_custom_call.1} parent=1 // pred_fallthru
      _
    // Predicated region
    $region14: #{tpu_custom_call.1} parent=1 // pred_check
      _
    $region15: #{tpu_custom_call.1} parent=1 // pred_check_branch
      %53 = sbr.rel (0) target = $region17
    $region16: #{tpu_custom_call.1} parent=1 // pred_region
      %55 = vsyncadd [#allocation11], 0
      %s56 = sshll.u32 %s3, 4
      %s57 = int_to_ptr.hbm [resolvable:$true] %s56
      %s58 = sshll.u32 [#allocation10], 4
      %s59 = int_to_ptr.vmem [resolvable:$true] %s58
      %64 = dma.hbm_to_vmem [thread:$0]  %s57, 256, %s59, [#allocation11], 128, 128, 8
    $region17: #{tpu_custom_call.1} parent=1 // pred_fallthru
      _
    // Predicated region
    $region18: #{tpu_custom_call.1} parent=1 // pred_check
      _
    $region19: #{tpu_custom_call.1} parent=1 // pred_check_branch
      %66 = sbr.rel (0) target = $region21
    $region20: #{tpu_custom_call.1} parent=1 // pred_region
      %68 = dma.done [#allocation5], 2048
    $region21: #{tpu_custom_call.1} parent=1 // pred_fallthru
      _
    // Predicated region
    $region22: #{tpu_custom_call.1} parent=1 // pred_check
      _
    $region23: #{tpu_custom_call.1} parent=1 // pred_check_branch
      %70 = sbr.rel (0) target = $region25
    $region24: #{tpu_custom_call.1} parent=1 // pred_region
      %72 = dma.done [#allocation8], 256
    $region25: #{tpu_custom_call.1} parent=1 // pred_fallthru
      _
    // Predicated region
    $region26: #{tpu_custom_call.1} parent=1 // pred_check
      _
    $region27: #{tpu_custom_call.1} parent=1 // pred_check_branch
      %74 = sbr.rel (0) target = $region29
    $region28: #{tpu_custom_call.1} parent=1 // pred_region
      %76 = dma.done [#allocation8], 256
    $region29: #{tpu_custom_call.1} parent=1 // pred_fallthru
      _
    // Predicated region
    $region30: #{tpu_custom_call.1} parent=1 // pred_check
      _
    $region31: #{tpu_custom_call.1} parent=1 // pred_check_branch
      %78 = sbr.rel (0) target = $region33
    $region32: #{tpu_custom_call.1} parent=1 // pred_region
      %80 = dma.done [#allocation11], 256
    $region33: #{tpu_custom_call.1} parent=1 // pred_fallthru
      _
    %p81 = scmp.eq.s32.totalorder 0, 0
    // Predicated region
    $region34: #{tpu_custom_call.1} parent=1 // pred_check
      %p82 = pneg %p81
    $region35: #{tpu_custom_call.1} parent=1 // pred_check_branch
      %84 = sbr.rel (%p82) target = $region37
    $region36: #{tpu_custom_call.1} parent=1 // pred_region
      %vm85 = vcmask 7168
      %86 = vst.msk [vmem:[#allocation2] sm:$0xff] %vm85, 0.0
      %87 = vst.msk [vmem:[#allocation2 + $0x8] sm:$0xff] %vm85, 0.0
      %88 = vst.msk [vmem:[#allocation3] sm:$0xff] %vm85, 0.0
      %89 = vst.msk [vmem:[#allocation3 + $0x8] sm:$0xff] %vm85, 0.0
    $region37: #{tpu_custom_call.1} parent=1 // pred_fallthru
      _
    %v90 = vld [vmem:[#allocation4] sm:$0xff]
    %v91 = vld [vmem:[#allocation4 + $0x8] sm:$0xff]
    %v92 = vld [vmem:[#allocation4 + $0x10] sm:$0xff]
    %v93 = vld [vmem:[#allocation4 + $0x18] sm:$0xff]
    %v94 = vld [vmem:[#allocation4 + $0x20] sm:$0xff]
    %v95 = vld [vmem:[#allocation4 + $0x28] sm:$0xff]
    %v96 = vld [vmem:[#allocation4 + $0x30] sm:$0xff]
    %v97 = vld [vmem:[#allocation4 + $0x38] sm:$0xff]
    %v98 = vld [vmem:[#allocation4 + $0x40] sm:$0xff]
    %v99 = vld [vmem:[#allocation4 + $0x48] sm:$0xff]
    %v100 = vld [vmem:[#allocation4 + $0x50] sm:$0xff]
    %v101 = vld [vmem:[#allocation4 + $0x58] sm:$0xff]
    %v102 = vld [vmem:[#allocation4 + $0x60] sm:$0xff]
    %v103 = vld [vmem:[#allocation4 + $0x68] sm:$0xff]
    %v104 = vld [vmem:[#allocation4 + $0x70] sm:$0xff]
    %v105 = vld [vmem:[#allocation4 + $0x78] sm:$0xff]
    %v106 = vld [vmem:[#allocation7] sm:$0xff]
    %v107 = vld [vmem:[#allocation7 + $0x8] sm:$0xff]
    %v108 = vld [vmem:[#allocation9] sm:$0xff]
    %v109 = vld [vmem:[#allocation9 + $0x8] sm:$0xff]
    %v110 = vld [vmem:[#allocation10] sm:$0xff]
    %v111 = vld [vmem:[#allocation10 + $0x8] sm:$0xff]
    %v112 = vmul.f32 %v106, %v108
    %v113 = vmul.f32 %v107, %v109
    %v114 = vmul.f32 %v112, 2.2675737e-05
    %v115 = vmul.f32 %v113, 2.2675737e-05
    %116 = vmatpush.msra.mxu0 %v105
    %117 = vmatpush.msra.mxu0 %v104
    %118 = vmatpush.msra.mxu0 %v103
    %119 = vmatpush.msra.mxu0 %v102
    %120 = vmatpush.msra.mxu0 %v101
    %121 = vmatpush.msra.mxu0 %v100
    %122 = vmatpush.msra.mxu0 %v99
    %123 = vmatpush.msra.mxu0 %v98
    %124 = vmatpush.msra.mxu0 %v97
    %125 = vmatpush.msra.mxu0 %v96
    %126 = vmatpush.msra.mxu0 %v95
    %127 = vmatpush.msra.mxu0 %v94
    %128 = vmatpush.msra.mxu0 %v93
    %129 = vmatpush.msra.mxu0 %v92
    %130 = vmatpush.msra.mxu0 %v91
    %131 = vmatpush.msra.mxu0 %v90
    %132 = vmatmul.f32.gmra.mxu0 %v114
    %v133 = vpop.f32.mrf.mxu0
    %v134 = vadd.f32 0.0, %v133
    %135 = vmatmul.f32.gmra.mxu0 %v115
    %v136 = vpop.f32.mrf.mxu0
    %v137 = vadd.f32 0.0, %v136
    %138 = vdwg.mxu0
    %v139 = vld [vmem:[#allocation2] sm:$0xff]
    %v140 = vld [vmem:[#allocation2 + $0x8] sm:$0xff]
    %142 = vset.pattern.permute.xlu0 0
    %143 = vperm.xlu0 %142, %v139
    %v144 = vpop.permute.xlu0 %143
    %147 = vset.pattern.permute.xlu0 0
    %148 = vperm.xlu0 %147, %v140
    %v149 = vpop.permute.xlu0 %148
    %v151 = vadd.f32 %v144, %v134
    %v152 = vadd.f32 %v149, %v137
    %v153 = vfloor.f32 %v151
    %v154 = vfloor.f32 %v152
    %v155 = vsub.f32 %v151, %v153
    %v156 = vsub.f32 %v152, %v154
    %v157 = vmul.f32 %v155, 6.2831855
    %v158 = vmul.f32 %v156, 6.2831855
    %v159 = vand.u32 2147483647, %v157
    %vm160 = vcmp.le.f32.partialorder %v159, 0.7853982
    %vm161 = vcmp.lt.s32.totalorder %v157, 0
    %v162 = vand.u32 %v157, 2139095040
    %v163 = vshrl.u32 %v162, 23
    %v164 = vsub.s32 %v163, 127
    %v165 = vand.u32 2147483647, %v157
    %v166 = vand.u32 %v165, 8388607
    %v167 = vor.u32 %v166, 8388608
    %v168 = vsub.s32 0, %v167
    %v169 = vadd.s32 %v164, 1
    %vm170 = vcmp.gt.s32.totalorder %v169, 0
    %v171 = vsel %vm170, %v169, 0
    %v172 = vshrl.u32 %v171, 5
    %v173 = vand.u32 %v171, 31
    %v174 = vsub.s32 32, %v173
    %v175 = vshrl.u32 683565275, %v174
    %v176 = vshll.u32 683565275, %v173
    %v177 = vshrl.u32 2475754826, %v174
    %v178 = vor.u32 %v176, %v177
    %v179 = vshll.u32 2475754826, %v173
    %v180 = vshrl.u32 2131351028, %v174
    %v181 = vor.u32 %v179, %v180
    %v182 = vshll.u32 2131351028, %v173
    %v183 = vshrl.u32 2102212464, %v174
    %v184 = vor.u32 %v182, %v183
    %v185 = vshll.u32 2102212464, %v173
    %v186 = vshrl.u32 920167782, %v174
    %v187 = vor.u32 %v185, %v186
    %v188 = vshll.u32 920167782, %v173
    %v189 = vshrl.u32 1326507024, %v174
    %v190 = vor.u32 %v188, %v189
    %vm191 = vcmp.lt.s32.totalorder %v172, 1
    %vm192 = vcmp.lt.s32.totalorder %v172, 2
    %vm193 = vcmp.lt.s32.totalorder %v172, 3
    %vm194 = vcmp.lt.s32.totalorder %v172, 4
    %v195 = vsel %vm191, %v175, %v178
    %v196 = vsel %vm194, %v184, 2102212464
    %v197 = vsel %vm193, %v181, %v196
    %v198 = vsel %vm192, %v195, %v197
    %v199 = vsel %vm191, %v178, %v181
    %v200 = vsel %vm194, %v187, 920167782
    %v201 = vsel %vm193, %v184, %v200
    %v202 = vsel %vm192, %v199, %v201
    %v203 = vsel %vm191, %v181, %v184
    %v204 = vsel %vm194, %v190, 1326507024
    %v205 = vsel %vm193, %v187, %v204
    %v206 = vsel %vm192, %v203, %v205
    %v207 = vshll.u32 %v167, 8
    %v208 = vand.u32 %v207, 65535
    %v209 = vshrl.u32 %v207, 16
    %v210 = vand.u32 %v206, 65535
    %v211 = vshrl.u32 %v206, 16
    %v212 = vmul.u32 %v208, %v210
    %v213 = vmul.u32 %v208, %v211
    %v214 = vmul.u32 %v209, %v210
    %v215 = vmul.u32 %v209, %v211
    %v216 = vshll.u32 %v213, 16
    %v217 = vshrl.u32 %v213, 16
    %v218 = vshll.u32 %v214, 16
    %v219 = vshrl.u32 %v214, 16
    %vm220 = vc.u32 %v212, %v216
    %v221 = vsel %vm220, 1, 0
    %v222 = vadd.s32 %v212, %v216
    %v223 = vadd.s32 %v215, %v221
    %vm224 = vc.u32 %v222, %v218
    %v225 = vsel %vm224, 1, 0
    %v226 = vadd.s32 %v222, %v218
    %v227 = vadd.s32 %v223, %v225
    %v228 = vadd.s32 %v227, %v217
    %v229 = vadd.s32 %v228, %v219
    %v230 = vand.u32 %v207, 65535
    %v231 = vshrl.u32 %v207, 16
    %v232 = vand.u32 %v202, 65535
    %v233 = vshrl.u32 %v202, 16
    %v234 = vmul.u32 %v230, %v232
    %v235 = vmul.u32 %v230, %v233
    %v236 = vmul.u32 %v231, %v232
    %v237 = vmul.u32 %v231, %v233
    %v238 = vshll.u32 %v235, 16
    %v239 = vshrl.u32 %v235, 16
    %v240 = vshll.u32 %v236, 16
    %v241 = vshrl.u32 %v236, 16
    %vm242 = vc.u32 %v234, %v238
    %v243 = vsel %vm242, 1, 0
    %v244 = vadd.s32 %v234, %v238
    %v245 = vadd.s32 %v237, %v243
    %vm246 = vc.u32 %v244, %v240
    %v247 = vsel %vm246, 1, 0
    %v248 = vadd.s32 %v244, %v240
    %v249 = vadd.s32 %v245, %v247
    %v250 = vadd.s32 %v249, %v239
    %v251 = vadd.s32 %v250, %v241
    %v252 = vmul.u32 %v207, %v198
    %v253 = vadd.s32 %v229, %v248
    %vm254 = vc.u32 %v229, %v248
    %v255 = vadd.s32 %v251, 1
    %v256 = vsel %vm254, %v255, %v251
    %v257 = vadd.s32 %v252, %v256
    %v258 = vadd.s32 %v257, 536870912
    %v259 = vshrl.u32 %v258, 30
    %v260 = vshll.u32 %v259, 30
    %v261 = vsub.s32 %v257, %v260
    %vm262 = vcmp.lt.s32.totalorder %v261, 0
    %v263 = vsub.s32 0, %v261
    %v264 = vsel %vm262, %v263, %v261
    %v265 = vclz %v264
    %v266 = vsub.s32 %v265, 2
    %vm267 = vcmp.gt.s32.totalorder 0, %v266
    %v268 = vsel %vm267, 0, %v266
    %v269 = vsub.s32 32, %v268
    %v270 = vshll.u32 %v261, %v268
    %v271 = vshrl.u32 %v253, %v269
    %v272 = vor.u32 %v270, %v271
    %v273 = vsub.s32 4294967266, %v268
    %v274 = vadd.s32 %v273, 127
    %v275 = vshll.u32 %v274, 23
    %v276 = vor.u32 4788187, %v275
    %v277 = vand.u32 2147483647, %v276
    %v279 = vcvt.s32.f32 %v272
    %v280 = vmul.f32 %v279, %v277
    %v281 = vxor.u32 %v280, 2147483648
    %v282 = vsel %vm161, %v281, %v280
    %v283 = vsub.s32 4, %v259
    %v284 = vsel %vm161, %v283, %v259
    %v285 = vsel %vm160, %v157, %v282
    %v286 = vsel %vm160, 0, %v284
    %v287 = vmul.f32 %v285, %v285
    %v288 = vmul.f32 %v287, -0.001358992
    %v289 = vadd.f32 %v288, 0.041655596
    %v290 = vmul.f32 %v287, %v289
    %v291 = vadd.f32 %v290, -0.4999988
    %v292 = vmul.f32 %v287, %v291
    %v293 = vadd.f32 1.0, %v292
    %v294 = vmul.f32 %v285, %v285
    %v295 = vmul.f32 %v294, -0.00019511016
    %v296 = vadd.f32 %v295, 0.008332121
    %v297 = vmul.f32 %v294, %v296
    %v298 = vadd.f32 %v297, -0.16666654
    %v299 = vmul.f32 %v294, %v298
    %v300 = vadd.f32 %v299, 1.0
    %v301 = vmul.f32 %v300, %v285
    %vm302 = vweird.f32 %v157
    %v303 = vadd.s32 %v286, 3
    %v304 = vand.u32 %v303, 3
    %vm305 = vcmp.lt.s32.totalorder %v304, 2
    %vm306 = vcmp.eq.s32.totalorder %v304, 0
    %v307 = vxor.u32 %v301, 2147483648
    %v308 = vsel %vm306, %v293, %v307
    %vm309 = vcmp.eq.s32.totalorder %v304, 2
    %v310 = vxor.u32 %v293, 2147483648
    %v311 = vsel %vm309, %v310, %v301
    %v312 = vsel %vm305, %v308, %v311
    %v313 = vsel %vm302, nan, %v312
    %v314 = vand.u32 2147483647, %v158
    %vm315 = vcmp.le.f32.partialorder %v314, 0.7853982
    %vm316 = vcmp.lt.s32.totalorder %v158, 0
    %v317 = vand.u32 %v158, 2139095040
    %v318 = vshrl.u32 %v317, 23
    %v319 = vsub.s32 %v318, 127
    %v320 = vand.u32 2147483647, %v158
    %v321 = vand.u32 %v320, 8388607
    %v322 = vor.u32 %v321, 8388608
    %v323 = vsub.s32 0, %v322
    %v324 = vadd.s32 %v319, 1
    %vm325 = vcmp.gt.s32.totalorder %v324, 0
    %v326 = vsel %vm325, %v324, 0
    %v327 = vshrl.u32 %v326, 5
    %v328 = vand.u32 %v326, 31
    %v329 = vsub.s32 32, %v328
    %v330 = vshrl.u32 683565275, %v329
    %v331 = vshll.u32 683565275, %v328
    %v332 = vshrl.u32 2475754826, %v329
    %v333 = vor.u32 %v331, %v332
    %v334 = vshll.u32 2475754826, %v328
    %v335 = vshrl.u32 2131351028, %v329
    %v336 = vor.u32 %v334, %v335
    %v337 = vshll.u32 2131351028, %v328
    %v338 = vshrl.u32 2102212464, %v329
    %v339 = vor.u32 %v337, %v338
    %v340 = vshll.u32 2102212464, %v328
    %v341 = vshrl.u32 920167782, %v329
    %v342 = vor.u32 %v340, %v341
    %v343 = vshll.u32 920167782, %v328
    %v344 = vshrl.u32 1326507024, %v329
    %v345 = vor.u32 %v343, %v344
    %vm346 = vcmp.lt.s32.totalorder %v327, 1
    %vm347 = vcmp.lt.s32.totalorder %v327, 2
    %vm348 = vcmp.lt.s32.totalorder %v327, 3
    %vm349 = vcmp.lt.s32.totalorder %v327, 4
    %v350 = vsel %vm346, %v330, %v333
    %v351 = vsel %vm349, %v339, 2102212464
    %v352 = vsel %vm348, %v336, %v351
    %v353 = vsel %vm347, %v350, %v352
    %v354 = vsel %vm346, %v333, %v336
    %v355 = vsel %vm349, %v342, 920167782
    %v356 = vsel %vm348, %v339, %v355
    %v357 = vsel %vm347, %v354, %v356
    %v358 = vsel %vm346, %v336, %v339
    %v359 = vsel %vm349, %v345, 1326507024
    %v360 = vsel %vm348, %v342, %v359
    %v361 = vsel %vm347, %v358, %v360
    %v362 = vshll.u32 %v322, 8
    %v363 = vand.u32 %v362, 65535
    %v364 = vshrl.u32 %v362, 16
    %v365 = vand.u32 %v361, 65535
    %v366 = vshrl.u32 %v361, 16
    %v367 = vmul.u32 %v363, %v365
    %v368 = vmul.u32 %v363, %v366
    %v369 = vmul.u32 %v364, %v365
    %v370 = vmul.u32 %v364, %v366
    %v371 = vshll.u32 %v368, 16
    %v372 = vshrl.u32 %v368, 16
    %v373 = vshll.u32 %v369, 16
    %v374 = vshrl.u32 %v369, 16
    %vm375 = vc.u32 %v367, %v371
    %v376 = vsel %vm375, 1, 0
    %v377 = vadd.s32 %v367, %v371
    %v378 = vadd.s32 %v370, %v376
    %vm379 = vc.u32 %v377, %v373
    %v380 = vsel %vm379, 1, 0
    %v381 = vadd.s32 %v377, %v373
    %v382 = vadd.s32 %v378, %v380
    %v383 = vadd.s32 %v382, %v372
    %v384 = vadd.s32 %v383, %v374
    %v385 = vand.u32 %v362, 65535
    %v386 = vshrl.u32 %v362, 16
    %v387 = vand.u32 %v357, 65535
    %v388 = vshrl.u32 %v357, 16
    %v389 = vmul.u32 %v385, %v387
    %v390 = vmul.u32 %v385, %v388
    %v391 = vmul.u32 %v386, %v387
    %v392 = vmul.u32 %v386, %v388
    %v393 = vshll.u32 %v390, 16
    %v394 = vshrl.u32 %v390, 16
    %v395 = vshll.u32 %v391, 16
    %v396 = vshrl.u32 %v391, 16
    %vm397 = vc.u32 %v389, %v393
    %v398 = vsel %vm397, 1, 0
    %v399 = vadd.s32 %v389, %v393
    %v400 = vadd.s32 %v392, %v398
    %vm401 = vc.u32 %v399, %v395
    %v402 = vsel %vm401, 1, 0
    %v403 = vadd.s32 %v399, %v395
    %v404 = vadd.s32 %v400, %v402
    %v405 = vadd.s32 %v404, %v394
    %v406 = vadd.s32 %v405, %v396
    %v407 = vmul.u32 %v362, %v353
    %v408 = vadd.s32 %v384, %v403
    %vm409 = vc.u32 %v384, %v403
    %v410 = vadd.s32 %v406, 1
    %v411 = vsel %vm409, %v410, %v406
    %v412 = vadd.s32 %v407, %v411
    %v413 = vadd.s32 %v412, 536870912
    %v414 = vshrl.u32 %v413, 30
    %v415 = vshll.u32 %v414, 30
    %v416 = vsub.s32 %v412, %v415
    %vm417 = vcmp.lt.s32.totalorder %v416, 0
    %v418 = vsub.s32 0, %v416
    %v419 = vsel %vm417, %v418, %v416
    %v420 = vclz %v419
    %v421 = vsub.s32 %v420, 2
    %vm422 = vcmp.gt.s32.totalorder 0, %v421
    %v423 = vsel %vm422, 0, %v421
    %v424 = vsub.s32 32, %v423
    %v425 = vshll.u32 %v416, %v423
    %v426 = vshrl.u32 %v408, %v424
    %v427 = vor.u32 %v425, %v426
    %v428 = vsub.s32 4294967266, %v423
    %v429 = vadd.s32 %v428, 127
    %v430 = vshll.u32 %v429, 23
    %v431 = vor.u32 4788187, %v430
    %v432 = vand.u32 2147483647, %v431
    %v434 = vcvt.s32.f32 %v427
    %v435 = vmul.f32 %v434, %v432
    %v436 = vxor.u32 %v435, 2147483648
    %v437 = vsel %vm316, %v436, %v435
    %v438 = vsub.s32 4, %v414
    %v439 = vsel %vm316, %v438, %v414
    %v440 = vsel %vm315, %v158, %v437
    %v441 = vsel %vm315, 0, %v439
    %v442 = vmul.f32 %v440, %v440
    %v443 = vmul.f32 %v442, -0.001358992
    %v444 = vadd.f32 %v443, 0.041655596
    %v445 = vmul.f32 %v442, %v444
    %v446 = vadd.f32 %v445, -0.4999988
    %v447 = vmul.f32 %v442, %v446
    %v448 = vadd.f32 1.0, %v447
    %v449 = vmul.f32 %v440, %v440
    %v450 = vmul.f32 %v449, -0.00019511016
    %v451 = vadd.f32 %v450, 0.008332121
    %v452 = vmul.f32 %v449, %v451
    %v453 = vadd.f32 %v452, -0.16666654
    %v454 = vmul.f32 %v449, %v453
    %v455 = vadd.f32 %v454, 1.0
    %v456 = vmul.f32 %v455, %v440
    %vm457 = vweird.f32 %v158
    %v458 = vadd.s32 %v441, 3
    %v459 = vand.u32 %v458, 3
    %vm460 = vcmp.lt.s32.totalorder %v459, 2
    %vm461 = vcmp.eq.s32.totalorder %v459, 0
    %v462 = vxor.u32 %v456, 2147483648
    %v463 = vsel %vm461, %v448, %v462
    %vm464 = vcmp.eq.s32.totalorder %v459, 2
    %v465 = vxor.u32 %v448, 2147483648
    %v466 = vsel %vm464, %v465, %v456
    %v467 = vsel %vm460, %v463, %v466
    %v468 = vsel %vm457, nan, %v467
    %469 = vadd.xlane.f32.xlu0 %v114
    %v470 = vpop.xlane.xlu0 %469
    %471 = vadd.xlane.f32.xlu0 %v115
    %v472 = vpop.xlane.xlu0 %471
    %v473 = vadd.f32 %v139, %v470
    %v474 = vadd.f32 %v140, %v472
    %v475 = vfloor.f32 %v473
    %v476 = vfloor.f32 %v474
    %v477 = vsub.f32 %v473, %v475
    %v478 = vsub.f32 %v474, %v476
    %vm479 = vcmask 7168
    %480 = vst.msk [vmem:[#allocation2] sm:$0xff] %vm479, %v477
    %481 = vst.msk [vmem:[#allocation2 + $0x8] sm:$0xff] %vm479, %v478
    %v482 = vmul.f32 %v112, %v110
    %v483 = vmul.f32 %v113, %v111
    %v484 = vmul.f32 %v313, %v482
    %v485 = vmul.f32 %v468, %v483
    %v486 = vadd.f32 %v106, %v484
    %v487 = vadd.f32 %v107, %v485
    %v488 = vmul.f32 %v486, 2.2675737e-05
    %v489 = vmul.f32 %v487, 2.2675737e-05
    %490 = vmatpush.msra.mxu0 %v105
    %491 = vmatpush.msra.mxu0 %v104
    %492 = vmatpush.msra.mxu0 %v103
    %493 = vmatpush.msra.mxu0 %v102
    %494 = vmatpush.msra.mxu0 %v101
    %495 = vmatpush.msra.mxu0 %v100
    %496 = vmatpush.msra.mxu0 %v99
    %497 = vmatpush.msra.mxu0 %v98
    %498 = vmatpush.msra.mxu0 %v97
    %499 = vmatpush.msra.mxu0 %v96
    %500 = vmatpush.msra.mxu0 %v95
    %501 = vmatpush.msra.mxu0 %v94
    %502 = vmatpush.msra.mxu0 %v93
    %503 = vmatpush.msra.mxu0 %v92
    %504 = vmatpush.msra.mxu0 %v91
    %505 = vmatpush.msra.mxu0 %v90
    %506 = vmatmul.f32.gmra.mxu0 %v488
    %v507 = vpop.f32.mrf.mxu0
    %v508 = vadd.f32 0.0, %v507
    %509 = vmatmul.f32.gmra.mxu0 %v489
    %v510 = vpop.f32.mrf.mxu0
    %v511 = vadd.f32 0.0, %v510
    %512 = vdwg.mxu0
    %v513 = vld [vmem:[#allocation3] sm:$0xff]
    %v514 = vld [vmem:[#allocation3 + $0x8] sm:$0xff]
    %516 = vset.pattern.permute.xlu0 0
    %517 = vperm.xlu0 %516, %v513
    %v518 = vpop.permute.xlu0 %517
    %521 = vset.pattern.permute.xlu0 0
    %522 = vperm.xlu0 %521, %v514
    %v523 = vpop.permute.xlu0 %522
    %v525 = vadd.f32 %v518, %v508
    %v526 = vadd.f32 %v523, %v511
    %v527 = vfloor.f32 %v525
    %v528 = vfloor.f32 %v526
    %v529 = vsub.f32 %v525, %v527
    %v530 = vsub.f32 %v526, %v528
    %v531 = vmul.f32 %v529, 6.2831855
    %v532 = vmul.f32 %v530, 6.2831855
    %v533 = vand.u32 2147483647, %v531
    %vm534 = vcmp.le.f32.partialorder %v533, 0.7853982
    %vm535 = vcmp.lt.s32.totalorder %v531, 0
    %v536 = vand.u32 %v531, 2139095040
    %v537 = vshrl.u32 %v536, 23
    %v538 = vsub.s32 %v537, 127
    %v539 = vand.u32 2147483647, %v531
    %v540 = vand.u32 %v539, 8388607
    %v541 = vor.u32 %v540, 8388608
    %v542 = vsub.s32 0, %v541
    %v543 = vadd.s32 %v538, 1
    %vm544 = vcmp.gt.s32.totalorder %v543, 0
    %v545 = vsel %vm544, %v543, 0
    %v546 = vshrl.u32 %v545, 5
    %v547 = vand.u32 %v545, 31
    %v548 = vsub.s32 32, %v547
    %v549 = vshrl.u32 683565275, %v548
    %v550 = vshll.u32 683565275, %v547
    %v551 = vshrl.u32 2475754826, %v548
    %v552 = vor.u32 %v550, %v551
    %v553 = vshll.u32 2475754826, %v547
    %v554 = vshrl.u32 2131351028, %v548
    %v555 = vor.u32 %v553, %v554
    %v556 = vshll.u32 2131351028, %v547
    %v557 = vshrl.u32 2102212464, %v548
    %v558 = vor.u32 %v556, %v557
    %v559 = vshll.u32 2102212464, %v547
    %v560 = vshrl.u32 920167782, %v548
    %v561 = vor.u32 %v559, %v560
    %v562 = vshll.u32 920167782, %v547
    %v563 = vshrl.u32 1326507024, %v548
    %v564 = vor.u32 %v562, %v563
    %vm565 = vcmp.lt.s32.totalorder %v546, 1
    %vm566 = vcmp.lt.s32.totalorder %v546, 2
    %vm567 = vcmp.lt.s32.totalorder %v546, 3
    %vm568 = vcmp.lt.s32.totalorder %v546, 4
    %v569 = vsel %vm565, %v549, %v552
    %v570 = vsel %vm568, %v558, 2102212464
    %v571 = vsel %vm567, %v555, %v570
    %v572 = vsel %vm566, %v569, %v571
    %v573 = vsel %vm565, %v552, %v555
    %v574 = vsel %vm568, %v561, 920167782
    %v575 = vsel %vm567, %v558, %v574
    %v576 = vsel %vm566, %v573, %v575
    %v577 = vsel %vm565, %v555, %v558
    %v578 = vsel %vm568, %v564, 1326507024
    %v579 = vsel %vm567, %v561, %v578
    %v580 = vsel %vm566, %v577, %v579
    %v581 = vshll.u32 %v541, 8
    %v582 = vand.u32 %v581, 65535
    %v583 = vshrl.u32 %v581, 16
    %v584 = vand.u32 %v580, 65535
    %v585 = vshrl.u32 %v580, 16
    %v586 = vmul.u32 %v582, %v584
    %v587 = vmul.u32 %v582, %v585
    %v588 = vmul.u32 %v583, %v584
    %v589 = vmul.u32 %v583, %v585
    %v590 = vshll.u32 %v587, 16
    %v591 = vshrl.u32 %v587, 16
    %v592 = vshll.u32 %v588, 16
    %v593 = vshrl.u32 %v588, 16
    %vm594 = vc.u32 %v586, %v590
    %v595 = vsel %vm594, 1, 0
    %v596 = vadd.s32 %v586, %v590
    %v597 = vadd.s32 %v589, %v595
    %vm598 = vc.u32 %v596, %v592
    %v599 = vsel %vm598, 1, 0
    %v600 = vadd.s32 %v596, %v592
    %v601 = vadd.s32 %v597, %v599
    %v602 = vadd.s32 %v601, %v591
    %v603 = vadd.s32 %v602, %v593
    %v604 = vand.u32 %v581, 65535
    %v605 = vshrl.u32 %v581, 16
    %v606 = vand.u32 %v576, 65535
    %v607 = vshrl.u32 %v576, 16
    %v608 = vmul.u32 %v604, %v606
    %v609 = vmul.u32 %v604, %v607
    %v610 = vmul.u32 %v605, %v606
    %v611 = vmul.u32 %v605, %v607
    %v612 = vshll.u32 %v609, 16
    %v613 = vshrl.u32 %v609, 16
    %v614 = vshll.u32 %v610, 16
    %v615 = vshrl.u32 %v610, 16
    %vm616 = vc.u32 %v608, %v612
    %v617 = vsel %vm616, 1, 0
    %v618 = vadd.s32 %v608, %v612
    %v619 = vadd.s32 %v611, %v617
    %vm620 = vc.u32 %v618, %v614
    %v621 = vsel %vm620, 1, 0
    %v622 = vadd.s32 %v618, %v614
    %v623 = vadd.s32 %v619, %v621
    %v624 = vadd.s32 %v623, %v613
    %v625 = vadd.s32 %v624, %v615
    %v626 = vmul.u32 %v581, %v572
    %v627 = vadd.s32 %v603, %v622
    %vm628 = vc.u32 %v603, %v622
    %v629 = vadd.s32 %v625, 1
    %v630 = vsel %vm628, %v629, %v625
    %v631 = vadd.s32 %v626, %v630
    %v632 = vadd.s32 %v631, 536870912
    %v633 = vshrl.u32 %v632, 30
    %v634 = vshll.u32 %v633, 30
    %v635 = vsub.s32 %v631, %v634
    %vm636 = vcmp.lt.s32.totalorder %v635, 0
    %v637 = vsub.s32 0, %v635
    %v638 = vsel %vm636, %v637, %v635
    %v639 = vclz %v638
    %v640 = vsub.s32 %v639, 2
    %vm641 = vcmp.gt.s32.totalorder 0, %v640
    %v642 = vsel %vm641, 0, %v640
    %v643 = vsub.s32 32, %v642
    %v644 = vshll.u32 %v635, %v642
    %v645 = vshrl.u32 %v627, %v643
    %v646 = vor.u32 %v644, %v645
    %v647 = vsub.s32 4294967266, %v642
    %v648 = vadd.s32 %v647, 127
    %v649 = vshll.u32 %v648, 23
    %v650 = vor.u32 4788187, %v649
    %v651 = vand.u32 2147483647, %v650
    %v653 = vcvt.s32.f32 %v646
    %v654 = vmul.f32 %v653, %v651
    %v655 = vxor.u32 %v654, 2147483648
    %v656 = vsel %vm535, %v655, %v654
    %v657 = vsub.s32 4, %v633
    %v658 = vsel %vm535, %v657, %v633
    %v659 = vsel %vm534, %v531, %v656
    %v660 = vsel %vm534, 0, %v658
    %v661 = vmul.f32 %v659, %v659
    %v662 = vmul.f32 %v661, -0.001358992
    %v663 = vadd.f32 %v662, 0.041655596
    %v664 = vmul.f32 %v661, %v663
    %v665 = vadd.f32 %v664, -0.4999988
    %v666 = vmul.f32 %v661, %v665
    %v667 = vadd.f32 1.0, %v666
    %v668 = vmul.f32 %v659, %v659
    %v669 = vmul.f32 %v668, -0.00019511016
    %v670 = vadd.f32 %v669, 0.008332121
    %v671 = vmul.f32 %v668, %v670
    %v672 = vadd.f32 %v671, -0.16666654
    %v673 = vmul.f32 %v668, %v672
    %v674 = vadd.f32 %v673, 1.0
    %v675 = vmul.f32 %v674, %v659
    %vm676 = vweird.f32 %v531
    %v677 = vadd.s32 %v660, 3
    %v678 = vand.u32 %v677, 3
    %vm679 = vcmp.lt.s32.totalorder %v678, 2
    %vm680 = vcmp.eq.s32.totalorder %v678, 0
    %v681 = vxor.u32 %v675, 2147483648
    %v682 = vsel %vm680, %v667, %v681
    %vm683 = vcmp.eq.s32.totalorder %v678, 2
    %v684 = vxor.u32 %v667, 2147483648
    %v685 = vsel %vm683, %v684, %v675
    %v686 = vsel %vm679, %v682, %v685
    %v687 = vsel %vm676, nan, %v686
    %v688 = vand.u32 2147483647, %v532
    %vm689 = vcmp.le.f32.partialorder %v688, 0.7853982
    %vm690 = vcmp.lt.s32.totalorder %v532, 0
    %v691 = vand.u32 %v532, 2139095040
    %v692 = vshrl.u32 %v691, 23
    %v693 = vsub.s32 %v692, 127
    %v694 = vand.u32 2147483647, %v532
    %v695 = vand.u32 %v694, 8388607
    %v696 = vor.u32 %v695, 8388608
    %v697 = vsub.s32 0, %v696
    %v698 = vadd.s32 %v693, 1
    %vm699 = vcmp.gt.s32.totalorder %v698, 0
    %v700 = vsel %vm699, %v698, 0
    %v701 = vshrl.u32 %v700, 5
    %v702 = vand.u32 %v700, 31
    %v703 = vsub.s32 32, %v702
    %v704 = vshrl.u32 683565275, %v703
    %v705 = vshll.u32 683565275, %v702
    %v706 = vshrl.u32 2475754826, %v703
    %v707 = vor.u32 %v705, %v706
    %v708 = vshll.u32 2475754826, %v702
    %v709 = vshrl.u32 2131351028, %v703
    %v710 = vor.u32 %v708, %v709
    %v711 = vshll.u32 2131351028, %v702
    %v712 = vshrl.u32 2102212464, %v703
    %v713 = vor.u32 %v711, %v712
    %v714 = vshll.u32 2102212464, %v702
    %v715 = vshrl.u32 920167782, %v703
    %v716 = vor.u32 %v714, %v715
    %v717 = vshll.u32 920167782, %v702
    %v718 = vshrl.u32 1326507024, %v703
    %v719 = vor.u32 %v717, %v718
    %vm720 = vcmp.lt.s32.totalorder %v701, 1
    %vm721 = vcmp.lt.s32.totalorder %v701, 2
    %vm722 = vcmp.lt.s32.totalorder %v701, 3
    %vm723 = vcmp.lt.s32.totalorder %v701, 4
    %v724 = vsel %vm720, %v704, %v707
    %v725 = vsel %vm723, %v713, 2102212464
    %v726 = vsel %vm722, %v710, %v725
    %v727 = vsel %vm721, %v724, %v726
    %v728 = vsel %vm720, %v707, %v710
    %v729 = vsel %vm723, %v716, 920167782
    %v730 = vsel %vm722, %v713, %v729
    %v731 = vsel %vm721, %v728, %v730
    %v732 = vsel %vm720, %v710, %v713
    %v733 = vsel %vm723, %v719, 1326507024
    %v734 = vsel %vm722, %v716, %v733
    %v735 = vsel %vm721, %v732, %v734
    %v736 = vshll.u32 %v696, 8
    %v737 = vand.u32 %v736, 65535
    %v738 = vshrl.u32 %v736, 16
    %v739 = vand.u32 %v735, 65535
    %v740 = vshrl.u32 %v735, 16
    %v741 = vmul.u32 %v737, %v739
    %v742 = vmul.u32 %v737, %v740
    %v743 = vmul.u32 %v738, %v739
    %v744 = vmul.u32 %v738, %v740
    %v745 = vshll.u32 %v742, 16
    %v746 = vshrl.u32 %v742, 16
    %v747 = vshll.u32 %v743, 16
    %v748 = vshrl.u32 %v743, 16
    %vm749 = vc.u32 %v741, %v745
    %v750 = vsel %vm749, 1, 0
    %v751 = vadd.s32 %v741, %v745
    %v752 = vadd.s32 %v744, %v750
    %vm753 = vc.u32 %v751, %v747
    %v754 = vsel %vm753, 1, 0
    %v755 = vadd.s32 %v751, %v747
    %v756 = vadd.s32 %v752, %v754
    %v757 = vadd.s32 %v756, %v746
    %v758 = vadd.s32 %v757, %v748
    %v759 = vand.u32 %v736, 65535
    %v760 = vshrl.u32 %v736, 16
    %v761 = vand.u32 %v731, 65535
    %v762 = vshrl.u32 %v731, 16
    %v763 = vmul.u32 %v759, %v761
    %v764 = vmul.u32 %v759, %v762
    %v765 = vmul.u32 %v760, %v761
    %v766 = vmul.u32 %v760, %v762
    %v767 = vshll.u32 %v764, 16
    %v768 = vshrl.u32 %v764, 16
    %v769 = vshll.u32 %v765, 16
    %v770 = vshrl.u32 %v765, 16
    %vm771 = vc.u32 %v763, %v767
    %v772 = vsel %vm771, 1, 0
    %v773 = vadd.s32 %v763, %v767
    %v774 = vadd.s32 %v766, %v772
    %vm775 = vc.u32 %v773, %v769
    %v776 = vsel %vm775, 1, 0
    %v777 = vadd.s32 %v773, %v769
    %v778 = vadd.s32 %v774, %v776
    %v779 = vadd.s32 %v778, %v768
    %v780 = vadd.s32 %v779, %v770
    %v781 = vmul.u32 %v736, %v727
    %v782 = vadd.s32 %v758, %v777
    %vm783 = vc.u32 %v758, %v777
    %v784 = vadd.s32 %v780, 1
    %v785 = vsel %vm783, %v784, %v780
    %v786 = vadd.s32 %v781, %v785
    %v787 = vadd.s32 %v786, 536870912
    %v788 = vshrl.u32 %v787, 30
    %v789 = vshll.u32 %v788, 30
    %v790 = vsub.s32 %v786, %v789
    %vm791 = vcmp.lt.s32.totalorder %v790, 0
    %v792 = vsub.s32 0, %v790
    %v793 = vsel %vm791, %v792, %v790
    %v794 = vclz %v793
    %v795 = vsub.s32 %v794, 2
    %vm796 = vcmp.gt.s32.totalorder 0, %v795
    %v797 = vsel %vm796, 0, %v795
    %v798 = vsub.s32 32, %v797
    %v799 = vshll.u32 %v790, %v797
    %v800 = vshrl.u32 %v782, %v798
    %v801 = vor.u32 %v799, %v800
    %v802 = vsub.s32 4294967266, %v797
    %v803 = vadd.s32 %v802, 127
    %v804 = vshll.u32 %v803, 23
    %v805 = vor.u32 4788187, %v804
    %v806 = vand.u32 2147483647, %v805
    %v808 = vcvt.s32.f32 %v801
    %v809 = vmul.f32 %v808, %v806
    %v810 = vxor.u32 %v809, 2147483648
    %v811 = vsel %vm690, %v810, %v809
    %v812 = vsub.s32 4, %v788
    %v813 = vsel %vm690, %v812, %v788
    %v814 = vsel %vm689, %v532, %v811
    %v815 = vsel %vm689, 0, %v813
    %v816 = vmul.f32 %v814, %v814
    %v817 = vmul.f32 %v816, -0.001358992
    %v818 = vadd.f32 %v817, 0.041655596
    %v819 = vmul.f32 %v816, %v818
    %v820 = vadd.f32 %v819, -0.4999988
    %v821 = vmul.f32 %v816, %v820
    %v822 = vadd.f32 1.0, %v821
    %v823 = vmul.f32 %v814, %v814
    %v824 = vmul.f32 %v823, -0.00019511016
    %v825 = vadd.f32 %v824, 0.008332121
    %v826 = vmul.f32 %v823, %v825
    %v827 = vadd.f32 %v826, -0.16666654
    %v828 = vmul.f32 %v823, %v827
    %v829 = vadd.f32 %v828, 1.0
    %v830 = vmul.f32 %v829, %v814
    %vm831 = vweird.f32 %v532
    %v832 = vadd.s32 %v815, 3
    %v833 = vand.u32 %v832, 3
    %vm834 = vcmp.lt.s32.totalorder %v833, 2
    %vm835 = vcmp.eq.s32.totalorder %v833, 0
    %v836 = vxor.u32 %v830, 2147483648
    %v837 = vsel %vm835, %v822, %v836
    %vm838 = vcmp.eq.s32.totalorder %v833, 2
    %v839 = vxor.u32 %v822, 2147483648
    %v840 = vsel %vm838, %v839, %v830
    %v841 = vsel %vm834, %v837, %v840
    %v842 = vsel %vm831, nan, %v841
    %843 = vst [vmem:[#allocation12] sm:$0xff] %v687
    %844 = vst [vmem:[#allocation12 + $0x8] sm:$0xff] %v842
    %v845 = vld [vmem:[#allocation3] sm:$0xff]
    %v846 = vld [vmem:[#allocation3 + $0x8] sm:$0xff]
    %847 = vadd.xlane.f32.xlu0 %v488
    %v848 = vpop.xlane.xlu0 %847
    %849 = vadd.xlane.f32.xlu0 %v489
    %v850 = vpop.xlane.xlu0 %849
    %v851 = vadd.f32 %v845, %v848
    %v852 = vadd.f32 %v846, %v850
    %v853 = vfloor.f32 %v851
    %v854 = vfloor.f32 %v852
    %v855 = vsub.f32 %v851, %v853
    %v856 = vsub.f32 %v852, %v854
    %857 = vst.msk [vmem:[#allocation3] sm:$0xff] %vm479, %v855
    %858 = vst.msk [vmem:[#allocation3 + $0x8] sm:$0xff] %vm479, %v856
    // Predicated region
    $region38: #{tpu_custom_call.1} parent=1 // pred_check
      _
    $region39: #{tpu_custom_call.1} parent=1 // pred_check_branch
      %860 = sbr.rel (0) target = $region41
    $region40: #{tpu_custom_call.1} parent=1 // pred_region
      %862 = vsyncadd [#allocation6], 0
      %s863 = sshll.u32 [#allocation12], 4
      %s864 = int_to_ptr.vmem [resolvable:$true] %s863
      %s865 = sshll.u32 %s4, 4
      %s866 = int_to_ptr.hbm [resolvable:$true] %s865
      %871 = dma.vmem_to_hbm [thread:$0]  %s864, 256, %s866, [#allocation6], 128, 128, 8
    $region41: #{tpu_custom_call.1} parent=1 // pred_fallthru
      _
    // Predicated region
    $region42: #{tpu_custom_call.1} parent=1 // pred_check
      _
    $region43: #{tpu_custom_call.1} parent=1 // pred_check_branch
      %873 = sbr.rel (0) target = $region45
    $region44: #{tpu_custom_call.1} parent=1 // pred_region
      %875 = dma.done [#allocation6], 256
    $region45: #{tpu_custom_call.1} parent=1 // pred_fallthru
      _
    %876 = vsyncpa [#allocation5], 1
    %877 = vsyncpa [#allocation8], 1
    %878 = vsyncpa [#allocation11], 1
    %879 = vsyncpa [#allocation6], 1

</llo_original>
